<compile_context>
chip_gen: v6e
topology: v6e:2x2x1
jax: 0.10.0
libtpu: 0.0.40
codegen_flags: <defaults>
</compile_context>

<pallas_src>
import numpy as np
import jax
import jax.numpy as jnp
from jax.experimental import pallas as pl
from jax.experimental.pallas import tpu as pltpu


def _delayed_embed_kernel(x_llm_ref, x_fmri_ref, w_flat_ref, w3_ref,
                          const_ref, o_ref):
    """One batch tile: two MXU mat-vec reductions + folded-bias add."""
    c = const_ref[0, 0]                                            # SMEM scalar

    # linear_llm2(linear_llm1(x)) collapsed to one (tb, T*F) @ (T*F, 1) matvec.
    y_llm = jnp.dot(x_llm_ref[...], w_flat_ref[...],
                    preferred_element_type=jnp.float32)            # (tb, 1)

    # linear_fmri(x_fmri): (tb, D) @ (D, 1)
    y_fmri = jnp.dot(x_fmri_ref[...], w3_ref[...],
                     preferred_element_type=jnp.float32)           # (tb, 1)

    o_ref[...] = (y_llm + y_fmri + c).astype(o_ref.dtype)


def _round_up(x, m):
    return ((x + m - 1) // m) * m


def _vmem_capacity_bytes():
    """Physical VMEM of the attached TPU; conservative (v7x) fallback."""
    try:
        return int(pltpu.get_tpu_info().vmem_capacity_bytes)
    except Exception:
        return 64 * 1024 * 1024


def delayed_embedding_linear_forward(x_llm, x_fmri, params, *, block_b=None):
    """Pallas forward.  x_llm: (B, T, F) f32, x_fmri: (B, D) f32 -> (B, 1) f32."""
    B, T, F = x_llm.shape
    Bf, D = x_fmri.shape
    assert B == Bf

    w1, b1 = params["w1"], params["b1"]   # (1, F), (1, 1)
    w2, b2 = params["w2"], params["b2"]   # (1, T), (1, 1)
    w3, b3 = params["w3"], params["b3"]   # (1, D), (1, 1)

    # ---- rank-1 collapse of the two LLM linears (exact) ------------------
    #   y_llm[b] = sum_{t,f} x[b,t,f] * w2[t] * w1[f] + b1*sum_t w2[t] + b2
    w_flat = (w2.reshape(T, 1) * w1.reshape(1, F)).reshape(T * F, 1)
    w_flat = w_flat.astype(jnp.float32)
    w3_col = w3.reshape(D, 1).astype(jnp.float32)
    const = (b2[0, 0] + b1[0, 0] * jnp.sum(w2) + b3[0, 0]).reshape(1, 1)
    const = const.astype(jnp.float32)

    # ---- lane-dense flatten of the LLM slab (free for contiguous input) --
    x_llm_2d = x_llm.reshape(B, T * F)

    # ---- per-generation tile / VMEM budget --------------------------------
    vmem_cap = _vmem_capacity_bytes()
    small_vmem = vmem_cap <= 64 * 1024 * 1024          # v7x-class chip
    if small_vmem:
        tile_budget = 6 * 1024 * 1024                  # per-input tile bytes
        vmem_limit = 32 * 1024 * 1024
    else:                                              # v5e / v6e: 128 MiB phys
        tile_budget = 16 * 1024 * 1024
        vmem_limit = 80 * 1024 * 1024

    row_bytes = (T * F + D) * 4
    if block_b is None:
        block_b = max(8, tile_budget // row_bytes)     # no artificial row cap
    tb = max(8, (block_b // 8) * 8)                    # sublane multiple
    tb = min(tb, _round_up(B, 8))                      # never exceed the batch
    n_blocks = pl.cdiv(B, tb)

    # v7x has 2 TensorCores; make sure a "parallel" grid has >= 2 steps.
    if small_vmem and n_blocks == 1 and B > 8:
        tb = max(8, ((tb // 2) // 8) * 8)
        n_blocks = pl.cdiv(B, tb)

    vmem = pltpu.MemorySpace.VMEM
    smem = pltpu.MemorySpace.SMEM

    cost = pl.CostEstimate(
        flops=2 * B * (T * F + D),
        transcendentals=0,
        bytes_accessed=4 * (B * (T * F + D + 1) + T * F + D + 1),
    )

    # No wrapper-side padding: the final partial block computes on masked
    # rows and Pallas only writes back the in-bounds rows of the output.
    out = pl.pallas_call(
        _delayed_embed_kernel,
        out_shape=jax.ShapeDtypeStruct((B, 1), jnp.float32),
        grid=(n_blocks,),
        in_specs=[
            pl.BlockSpec((tb, T * F), lambda i: (i, 0), memory_space=vmem),  # x_llm slab
            pl.BlockSpec((tb, D),     lambda i: (i, 0), memory_space=vmem),  # x_fmri
            pl.BlockSpec((T * F, 1),  lambda i: (0, 0), memory_space=vmem),  # W_flat (resident)
            pl.BlockSpec((D, 1),      lambda i: (0, 0), memory_space=vmem),  # w3     (resident)
            pl.BlockSpec(memory_space=smem),                                  # folded bias const
        ],
        out_specs=pl.BlockSpec((tb, 1), lambda i: (i, 0), memory_space=vmem),
        compiler_params=pltpu.CompilerParams(
            dimension_semantics=("parallel",),
            vmem_limit_bytes=vmem_limit,
        ),
        cost_estimate=cost,
    )(x_llm_2d, x_fmri, w_flat, w3_col, const)

    return out


def _reference(x_llm, x_fmri, params):
    """Pure-JAX reference mirroring the PyTorch forward."""
    h = jnp.einsum("btf,of->bto", x_llm, params["w1"])[..., 0] + params["b1"][0, 0]  # (B, T)
    y_llm = jnp.einsum("bt,ot->bo", h, params["w2"]) + params["b2"][0, 0]            # (B, 1)
    y_fmri = jnp.einsum("bd,od->bo", x_fmri, params["w3"]) + params["b3"][0, 0]      # (B, 1)
    return y_llm + y_fmri


if __name__ == "__main__":
    # Small shapes consistent with the module: B batches, T llm timesteps,
    # F llm features, D fmri features.
    B, T, F, D = 2, 8, 32, 16

    key = jax.random.PRNGKey(0)
    k_xl, k_xf, k_w1, k_b1, k_w2, k_b2, k_w3, k_b3 = jax.random.split(key, 8)

    x_llm = jax.random.normal(k_xl, (B, T, F), dtype=jnp.float32)
    x_fmri = jax.random.normal(k_xf, (B, D), dtype=jnp.float32)

    # nn.Linear-shaped params: weight (1, in), bias (1, 1).
    params = {
        "w1": jax.random.normal(k_w1, (1, F), dtype=jnp.float32) * 0.1,
        "b1": jax.random.normal(k_b1, (1, 1), dtype=jnp.float32) * 0.1,
        "w2": jax.random.normal(k_w2, (1, T), dtype=jnp.float32) * 0.1,
        "b2": jax.random.normal(k_b2, (1, 1), dtype=jnp.float32) * 0.1,
        "w3": jax.random.normal(k_w3, (1, D), dtype=jnp.float32) * 0.1,
        "b3": jax.random.normal(k_b3, (1, 1), dtype=jnp.float32) * 0.1,
    }

    out = delayed_embedding_linear_forward(x_llm, x_fmri, params)
    out = jax.block_until_ready(out)

    ref = _reference(x_llm, x_fmri, params)
    assert out.shape == (B, 1)
    np.testing.assert_allclose(np.asarray(out), np.asarray(ref), rtol=1e-5, atol=1e-5)

    print("KERNEL_OK")
</pallas_src>

<mosaic_0001>
module attributes {stable_mosaic.version = 11 : i64} {
  func.func @_delayed_embed_kernel(%arg0: i32, %arg1: memref<8x256xf32, #tpu.memory_space<vmem>>, %arg2: memref<8x16xf32, #tpu.memory_space<vmem>>, %arg3: memref<256x1xf32, #tpu.memory_space<vmem>>, %arg4: memref<16x1xf32, #tpu.memory_space<vmem>>, %arg5: memref<1x1xf32, #tpu.memory_space<smem>>, %arg6: memref<8x1xf32, #tpu.memory_space<vmem>>) attributes {dimension_semantics = [#tpu.dimension_semantics<parallel>], iteration_bounds = array<i64: 1>, scalar_prefetch = 0 : i64, scratch_operands = 0 : i64, tpu.core_type = #tpu.core_type<tc>, window_params = [{transform_indices = @transform_0, window_bounds = array<i64: 8, 256>}, {transform_indices = @transform_1, window_bounds = array<i64: 8, 16>}, {pipeline_mode = #tpu.pipeline_mode<synchronous>, transform_indices = @transform_2, window_bounds = array<i64: 256, 1>}, {pipeline_mode = #tpu.pipeline_mode<synchronous>, transform_indices = @transform_3, window_bounds = array<i64: 16, 1>}, {transform_indices = @transform_4, window_bounds = array<i64: 1, 1>}, {transform_indices = @transform_5, window_bounds = array<i64: 8, 1>}]} {
    %c0 = arith.constant 0 : index
    %c0_0 = arith.constant 0 : index
    %0 = memref.load %arg5[%c0, %c0_0] : memref<1x1xf32, #tpu.memory_space<smem>>
    %c0_1 = arith.constant 0 : index
    %c0_2 = arith.constant 0 : index
    %1 = vector.load %arg1[%c0_1, %c0_2] : memref<8x256xf32, #tpu.memory_space<vmem>>, vector<8x256xf32>
    %c0_3 = arith.constant 0 : index
    %c0_4 = arith.constant 0 : index
    %2 = vector.load %arg3[%c0_3, %c0_4] : memref<256x1xf32, #tpu.memory_space<vmem>>, vector<256x1xf32>
    %cst = arith.constant dense<0.000000e+00> : vector<8x1xf32>
    %3 = tpu.matmul %1, %2, %cst {dimension_numbers = #tpu.dot_dimension_numbers<[1], [0], [0], [1], [0, 0, 1, 1], [], []>} : vector<8x256xf32>, vector<256x1xf32>, vector<8x1xf32> -> vector<8x1xf32>
    %c0_5 = arith.constant 0 : index
    %c0_6 = arith.constant 0 : index
    %4 = vector.load %arg2[%c0_5, %c0_6] : memref<8x16xf32, #tpu.memory_space<vmem>>, vector<8x16xf32>
    %c0_7 = arith.constant 0 : index
    %c0_8 = arith.constant 0 : index
    %5 = vector.load %arg4[%c0_7, %c0_8] : memref<16x1xf32, #tpu.memory_space<vmem>>, vector<16x1xf32>
    %cst_9 = arith.constant dense<0.000000e+00> : vector<8x1xf32>
    %6 = tpu.matmul %4, %5, %cst_9 {dimension_numbers = #tpu.dot_dimension_numbers<[1], [0], [0], [1], [0, 0, 1, 1], [], []>} : vector<8x16xf32>, vector<16x1xf32>, vector<8x1xf32> -> vector<8x1xf32>
    %7 = arith.addf %3, %6 : vector<8x1xf32>
    %8 = vector.broadcast %0 : f32 to vector<8x1xf32>
    %9 = arith.addf %7, %8 : vector<8x1xf32>
    %c0_10 = arith.constant 0 : index
    %c0_11 = arith.constant 0 : index
    %10 = vector.load %arg6[%c0_10, %c0_11] : memref<8x1xf32, #tpu.memory_space<vmem>>, vector<8x1xf32>
    tpu.vector_store %arg6[%c0_10, %c0_11], %9 {strides = array<i32>} : memref<8x1xf32, #tpu.memory_space<vmem>>, vector<8x1xf32>,
    return
  }
  func.func @transform_0(%arg0: i32) -> (i32, i32) {
    %c0_i32 = arith.constant 0 : i32
    %c0_i32_0 = arith.constant 0 : i32
    return %arg0, %c0_i32 : i32, i32
  }
  func.func @transform_1(%arg0: i32) -> (i32, i32) {
    %c0_i32 = arith.constant 0 : i32
    %c0_i32_0 = arith.constant 0 : i32
    return %arg0, %c0_i32 : i32, i32
  }
  func.func @transform_2(%arg0: i32) -> (i32, i32) {
    %c0_i32 = arith.constant 0 : i32
    %c0_i32_0 = arith.constant 0 : i32
    %c0_i32_1 = arith.constant 0 : i32
    return %c0_i32, %c0_i32_0 : i32, i32
  }
  func.func @transform_3(%arg0: i32) -> (i32, i32) {
    %c0_i32 = arith.constant 0 : i32
    %c0_i32_0 = arith.constant 0 : i32
    %c0_i32_1 = arith.constant 0 : i32
    return %c0_i32, %c0_i32_0 : i32, i32
  }
  func.func @transform_4(%arg0: i32) -> (i32, i32) {
    %c0_i32 = arith.constant 0 : i32
    %c0_i32_0 = arith.constant 0 : i32
    %c0_i32_1 = arith.constant 0 : i32
    return %c0_i32, %c0_i32_0 : i32, i32
  }
  func.func @transform_5(%arg0: i32) -> (i32, i32) {
    %c0_i32 = arith.constant 0 : i32
    %c0_i32_0 = arith.constant 0 : i32
    return %arg0, %c0_i32 : i32, i32
  }
}

</mosaic_0001>

<llo_original>
// kernel: tpu_custom_call.1
$region0: #{tpu_custom_call.1}
  #allocation0 [shape = 'u32[]', space=smem, size = 0x4, offset = 0x4, fixed_abs, tag = 'smem constant byte address 0x4 - core index']
  #allocation1 [shape = 'u32[144,128]{1,0:T(1,128)}', space=vmem, size = 0x12000, scoped, tag = 'internal scratch']
  #allocation2 [shape = 'f32[1,1]{1,0:T(1,128)S(6)}', space=smem, size = 0x200, scoped, tag = 'scoped memory for tpu_custom_call.1']
  %s0 = inlined_call_operand.vmem [shape: f32[2,256], index: 0, kind: input, shape index: {}]
  %s1 = inlined_call_operand.vmem [shape: f32[2,16], index: 1, kind: input, shape index: {}]
  %s2 = inlined_call_operand.vmem [shape: f32[256,1], index: 2, kind: input, shape index: {}]
  %s3 = inlined_call_operand.vmem [shape: f32[16,1], index: 3, kind: input, shape index: {}]
  %s4 = inlined_call_operand.<no memory space> [shape: f32[1,1], index: 4, kind: input, shape index: {}]
  %s5 = inlined_call_operand.vmem [shape: f32[2,1], index: 5, kind: output, shape index: {}]
  %s6 = sld [smem:[#allocation0]]
  $region60: #{tpu_custom_call.1} parent=0
    _
  %s8 = ssub.s32 1, %s6
  %s9 = scalar_select 0, %s8, %s6
  %10 = sst [smem:[#allocation2]] %s4
  $region1: #{tpu_custom_call.1} parent=0
    #allocation3 [shape = 'u8[4096]{0}', space=vmem, size = 0x1000, scoped, tag = 'output window, operand 0, single buffered']
    // Predicated region
    $region2: #{tpu_custom_call.1} parent=1 // pred_check
      _
    $region3: #{tpu_custom_call.1} parent=1 // pred_check_branch
      %12 = sbr.rel (0) target = $region5
    $region4: #{tpu_custom_call.1} parent=1 // pred_region
      _
    $region5: #{tpu_custom_call.1} parent=1 // pred_fallthru
      _
    // Predicated region
    $region6: #{tpu_custom_call.1} parent=1 // pred_check
      _
    $region7: #{tpu_custom_call.1} parent=1 // pred_check_branch
      %14 = sbr.rel (0) target = $region9
    $region8: #{tpu_custom_call.1} parent=1 // pred_region
      _
    $region9: #{tpu_custom_call.1} parent=1 // pred_fallthru
      _
    // Predicated region
    $region10: #{tpu_custom_call.1} parent=1 // pred_check
      _
    $region11: #{tpu_custom_call.1} parent=1 // pred_check_branch
      %16 = sbr.rel (0) target = $region13
    $region12: #{tpu_custom_call.1} parent=1 // pred_region
      _
    $region13: #{tpu_custom_call.1} parent=1 // pred_fallthru
      _
    // Predicated region
    $region14: #{tpu_custom_call.1} parent=1 // pred_check
      _
    $region15: #{tpu_custom_call.1} parent=1 // pred_check_branch
      %18 = sbr.rel (0) target = $region17
    $region16: #{tpu_custom_call.1} parent=1 // pred_region
      _
    $region17: #{tpu_custom_call.1} parent=1 // pred_fallthru
      _
    // Predicated region
    $region18: #{tpu_custom_call.1} parent=1 // pred_check
      _
    $region19: #{tpu_custom_call.1} parent=1 // pred_check_branch
      %20 = sbr.rel (0) target = $region21
    $region20: #{tpu_custom_call.1} parent=1 // pred_region
      _
    $region21: #{tpu_custom_call.1} parent=1 // pred_fallthru
      _
    %s21 = sld [smem:[#allocation2]]
    %v22 = vld [vmem:[%s0] sm:$0xf]
    %v23 = vld [vmem:[%s0 + $0x4] sm:$0xf]
    %v24 = vld [vmem:[%s0 + $0x8] sm:$0xf]
    %v25 = vld [vmem:[%s0 + $0xc] sm:$0xf]
    %v26 = vld [vmem:[%s2] sm:$0xff]
    %v27 = vld [vmem:[%s2 + $0x8] sm:$0xff]
    %v28 = vld [vmem:[%s2 + $0x10] sm:$0xff]
    %v29 = vld [vmem:[%s2 + $0x18] sm:$0xff]
    %v30 = vld [vmem:[%s2 + $0x20] sm:$0xff]
    %v31 = vld [vmem:[%s2 + $0x28] sm:$0xff]
    %v32 = vld [vmem:[%s2 + $0x30] sm:$0xff]
    %v33 = vld [vmem:[%s2 + $0x38] sm:$0xff]
    %v34 = vld [vmem:[%s2 + $0x40] sm:$0xff]
    %v35 = vld [vmem:[%s2 + $0x48] sm:$0xff]
    %v36 = vld [vmem:[%s2 + $0x50] sm:$0xff]
    %v37 = vld [vmem:[%s2 + $0x58] sm:$0xff]
    %v38 = vld [vmem:[%s2 + $0x60] sm:$0xff]
    %v39 = vld [vmem:[%s2 + $0x68] sm:$0xff]
    %v40 = vld [vmem:[%s2 + $0x70] sm:$0xff]
    %v41 = vld [vmem:[%s2 + $0x78] sm:$0xff]
    %v42 = vld [vmem:[%s2 + $0x80] sm:$0xff]
    %v43 = vld [vmem:[%s2 + $0x88] sm:$0xff]
    %v44 = vld [vmem:[%s2 + $0x90] sm:$0xff]
    %v45 = vld [vmem:[%s2 + $0x98] sm:$0xff]
    %v46 = vld [vmem:[%s2 + $0xa0] sm:$0xff]
    %v47 = vld [vmem:[%s2 + $0xa8] sm:$0xff]
    %v48 = vld [vmem:[%s2 + $0xb0] sm:$0xff]
    %v49 = vld [vmem:[%s2 + $0xb8] sm:$0xff]
    %v50 = vld [vmem:[%s2 + $0xc0] sm:$0xff]
    %v51 = vld [vmem:[%s2 + $0xc8] sm:$0xff]
    %v52 = vld [vmem:[%s2 + $0xd0] sm:$0xff]
    %v53 = vld [vmem:[%s2 + $0xd8] sm:$0xff]
    %v54 = vld [vmem:[%s2 + $0xe0] sm:$0xff]
    %v55 = vld [vmem:[%s2 + $0xe8] sm:$0xff]
    %v56 = vld [vmem:[%s2 + $0xf0] sm:$0xff]
    %v57 = vld [vmem:[%s2 + $0xf8] sm:$0xff]
    %v58 = vld [vmem:[%s1] sm:$0xff]
    %v59 = vld [vmem:[%s3] sm:$0xff]
    %v60 = vld [vmem:[%s3 + $0x8] sm:$0xff]
    %vm61 = vcmask 130048
    %v63 = vsel %vm61, %v58, 0
    %65 = vmatprep.subr.mxu0 0.0
    %66 = vmatpush1.msra.mxu0 0.0
    %67 = vmatprep.subr.mxu0 0.0
    %68 = vmatpush1.msra.mxu0 0.0
    %69 = vmatprep.subr.mxu0 0.0
    %70 = vmatpush1.msra.mxu0 0.0
    %71 = vmatprep.subr.mxu0 0.0
    %72 = vmatpush1.msra.mxu0 0.0
    %73 = vmatprep.subr.mxu0 0.0
    %74 = vmatpush1.msra.mxu0 0.0
    %75 = vmatprep.subr.mxu0 0.0
    %76 = vmatpush1.msra.mxu0 0.0
    %77 = vmatprep.subr.mxu0 0.0
    %78 = vmatpush1.msra.mxu0 0.0
    %79 = vmatprep.subr.mxu0 0.0
    %80 = vmatpush1.msra.mxu0 0.0
    %81 = vmatprep.subr.mxu0 0.0
    %82 = vmatpush1.msra.mxu0 0.0
    %83 = vmatprep.subr.mxu0 0.0
    %84 = vmatpush1.msra.mxu0 0.0
    %85 = vmatprep.subr.mxu0 0.0
    %86 = vmatpush1.msra.mxu0 0.0
    %87 = vmatprep.subr.mxu0 0.0
    %88 = vmatpush1.msra.mxu0 0.0
    %89 = vmatprep.subr.mxu0 0.0
    %90 = vmatpush1.msra.mxu0 0.0
    %91 = vmatprep.subr.mxu0 0.0
    %92 = vmatpush1.msra.mxu0 0.0
    %93 = vmatprep.subr.mxu0 0.0
    %94 = vmatpush1.msra.mxu0 %v60
    %95 = vmatprep.subr.mxu0 0.0
    %96 = vmatpush1.msra.mxu0 %v59
    %97 = vmatprep.subr.mxu0 0.0
    %98 = vmatpush2.msra.mxu0 0.0
    %99 = vmatprep.subr.mxu0 0.0
    %100 = vmatpush2.msra.mxu0 0.0
    %101 = vmatprep.subr.mxu0 0.0
    %102 = vmatpush2.msra.mxu0 0.0
    %103 = vmatprep.subr.mxu0 0.0
    %104 = vmatpush2.msra.mxu0 0.0
    %105 = vmatprep.subr.mxu0 0.0
    %106 = vmatpush2.msra.mxu0 0.0
    %107 = vmatprep.subr.mxu0 0.0
    %108 = vmatpush2.msra.mxu0 0.0
    %109 = vmatprep.subr.mxu0 0.0
    %110 = vmatpush2.msra.mxu0 0.0
    %111 = vmatprep.subr.mxu0 0.0
    %112 = vmatpush2.msra.mxu0 0.0
    %113 = vmatprep.subr.mxu0 0.0
    %114 = vmatpush2.msra.mxu0 0.0
    %115 = vmatprep.subr.mxu0 0.0
    %116 = vmatpush2.msra.mxu0 0.0
    %117 = vmatprep.subr.mxu0 0.0
    %118 = vmatpush2.msra.mxu0 0.0
    %119 = vmatprep.subr.mxu0 0.0
    %120 = vmatpush2.msra.mxu0 0.0
    %121 = vmatprep.subr.mxu0 0.0
    %122 = vmatpush2.msra.mxu0 0.0
    %123 = vmatprep.subr.mxu0 0.0
    %124 = vmatpush2.msra.mxu0 0.0
    %125 = vmatprep.subr.mxu0 0.0
    %126 = vmatpush2.msra.mxu0 0.0
    %127 = vmatprep.subr.mxu0 0.0
    %128 = vmatpush2.msra.mxu0 0.0
    %129 = vmatprep.mubr.f32.mxu0 0.0
    %130 = vmatmul.mubr.f32.gmra.mxu0 %v63
    %v131 = vpop.f32.mrf.mxu0
    %v132 = vadd.f32 0.0, %v131
    %v133 = vpop.f32.mrf.mxu0
    %134 = vdwg.mxu0
    %v139 = vcombine.low %v22, %v23
    %v140 = vcombine.low %v24, %v25
    %v142 = vunpack.c.l.s4 1983009808
    %v143 = vunpack.c.0.s8 %v142
    %v144 = vlaneseq
    %v145 = vshrl.u32 %v144, 7
    %v146 = vsub.s32 %v143, %v145
    %v147 = vrot.slane %v139, %v146
    %v149 = vunpack.c.l.s4 1983009808
    %v150 = vunpack.c.0.s8 %v149
    %v151 = vlaneseq
    %v152 = vshrl.u32 %v151, 7
    %v153 = vsub.s32 %v150, %v152
    %v154 = vrot.slane %v140, %v153
    %v155 = vcombine.low %v147, %v154
    %v156 = vcombine.high %v147, %v154
    %159 = vmatprep.subr.mxu0 0.0
    %160 = vmatpush1.msra.mxu0 %v41
    %161 = vmatprep.subr.mxu0 0.0
    %162 = vmatpush1.msra.mxu0 %v40
    %163 = vmatprep.subr.mxu0 0.0
    %164 = vmatpush1.msra.mxu0 %v39
    %165 = vmatprep.subr.mxu0 0.0
    %166 = vmatpush1.msra.mxu0 %v38
    %167 = vmatprep.subr.mxu0 0.0
    %168 = vmatpush1.msra.mxu0 %v37
    %169 = vmatprep.subr.mxu0 0.0
    %170 = vmatpush1.msra.mxu0 %v36
    %171 = vmatprep.subr.mxu0 0.0
    %172 = vmatpush1.msra.mxu0 %v35
    %173 = vmatprep.subr.mxu0 0.0
    %174 = vmatpush1.msra.mxu0 %v34
    %175 = vmatprep.subr.mxu0 0.0
    %176 = vmatpush1.msra.mxu0 %v33
    %177 = vmatprep.subr.mxu0 0.0
    %178 = vmatpush1.msra.mxu0 %v32
    %179 = vmatprep.subr.mxu0 0.0
    %180 = vmatpush1.msra.mxu0 %v31
    %181 = vmatprep.subr.mxu0 0.0
    %182 = vmatpush1.msra.mxu0 %v30
    %183 = vmatprep.subr.mxu0 0.0
    %184 = vmatpush1.msra.mxu0 %v29
    %185 = vmatprep.subr.mxu0 0.0
    %186 = vmatpush1.msra.mxu0 %v28
    %187 = vmatprep.subr.mxu0 0.0
    %188 = vmatpush1.msra.mxu0 %v27
    %189 = vmatprep.subr.mxu0 0.0
    %190 = vmatpush1.msra.mxu0 %v26
    %191 = vmatprep.subr.mxu0 0.0
    %192 = vmatpush2.msra.mxu0 %v57
    %193 = vmatprep.subr.mxu0 0.0
    %194 = vmatpush2.msra.mxu0 %v56
    %195 = vmatprep.subr.mxu0 0.0
    %196 = vmatpush2.msra.mxu0 %v55
    %197 = vmatprep.subr.mxu0 0.0
    %198 = vmatpush2.msra.mxu0 %v54
    %199 = vmatprep.subr.mxu0 0.0
    %200 = vmatpush2.msra.mxu0 %v53
    %201 = vmatprep.subr.mxu0 0.0
    %202 = vmatpush2.msra.mxu0 %v52
    %203 = vmatprep.subr.mxu0 0.0
    %204 = vmatpush2.msra.mxu0 %v51
    %205 = vmatprep.subr.mxu0 0.0
    %206 = vmatpush2.msra.mxu0 %v50
    %207 = vmatprep.subr.mxu0 0.0
    %208 = vmatpush2.msra.mxu0 %v49
    %209 = vmatprep.subr.mxu0 0.0
    %210 = vmatpush2.msra.mxu0 %v48
    %211 = vmatprep.subr.mxu0 0.0
    %212 = vmatpush2.msra.mxu0 %v47
    %213 = vmatprep.subr.mxu0 0.0
    %214 = vmatpush2.msra.mxu0 %v46
    %215 = vmatprep.subr.mxu0 0.0
    %216 = vmatpush2.msra.mxu0 %v45
    %217 = vmatprep.subr.mxu0 0.0
    %218 = vmatpush2.msra.mxu0 %v44
    %219 = vmatprep.subr.mxu0 0.0
    %220 = vmatpush2.msra.mxu0 %v43
    %221 = vmatprep.subr.mxu0 0.0
    %222 = vmatpush2.msra.mxu0 %v42
    %223 = vmatprep.mubr.f32.mxu0 %v156
    %224 = vmatmul.mubr.f32.gmra.mxu0 %v155
    %v225 = vpop.f32.mrf.mxu0
    %v226 = vadd.f32 %v132, %v225
    %v227 = vpop.f32.mrf.mxu0
    %228 = vdwg.mxu0
    %v229 = vstv %s21
    %v230 = vadd.f32 %v226, %v229
    %vm231 = vcmask 7168
    %232 = vst.msk [vmem:[#allocation3] sm:$0xff] %vm231, %v230
    // Predicated region
    $region22: #{tpu_custom_call.1} parent=1 // pred_check
      _
    $region23: #{tpu_custom_call.1} parent=1 // pred_check_branch
      %234 = sbr.rel (0) target = $region25
    $region24: #{tpu_custom_call.1} parent=1 // pred_region
      // Predicated region
      $region26: #{tpu_custom_call.1} parent=24 // pred_check
        _
      $region27: #{tpu_custom_call.1} parent=24 // pred_check_branch
        %236 = sbr.rel (0) target = $region29
      $region28: #{tpu_custom_call.1} parent=24 // pred_region
        // Predicated region
        $region30: #{tpu_custom_call.1} parent=28 // pred_check
          _
        $region31: #{tpu_custom_call.1} parent=28 // pred_check_branch
          %238 = sbr.rel target = $region33
        $region32: #{tpu_custom_call.1} parent=28 // pred_region
          // Predicated region
          $region45: #{tpu_custom_call.1} parent=32 // pred_check
            _
          $region46: #{tpu_custom_call.1} parent=32 // pred_check_branch
            %254 = sbr.rel (0) target = $region48
          $region47: #{tpu_custom_call.1} parent=32 // pred_region
            %s256 = ssub.s32 4, 1
            loop: start=0, step=1, limit=1
            $region49: #{tpu_custom_call.1} parent=47 // loop_pre_header
              _
            $region50: #{tpu_custom_call.1} parent=47 // loop_header
              %s258 = sphi 0, %s262
              %p259 = scmp.ge.s32.totalorder %s258, 1
              %s263 = sphi [#allocation3], [#allocation3]
              %s264 = sphi %s5, %s5
            $region51: #{tpu_custom_call.1} parent=47 // loop_header_branch
              %261 = sbr.rel (%p259) target = $region55
            $region52: #{tpu_custom_call.1} parent=47 // loop_body
              %v265 = vld [vmem:[%s263] sm:%s256]
              %266 = vst [vmem:[%s264] sm:%s256] %v265
            $region53: #{tpu_custom_call.1} parent=47 // loop_footer
              %s262 = sadd.s32 1, %s258
            $region54: #{tpu_custom_call.1} parent=47 // loop_footer_branch
              %257 = sbr.rel target = $region50
            $region55: #{tpu_custom_call.1} parent=47 // loop_exit
              _
          $region48: #{tpu_custom_call.1} parent=32 // pred_fallthru
            _
        $region33: #{tpu_custom_call.1} parent=28 // pred_fallthru
          _
        // Predicated region
        $region34: #{tpu_custom_call.1} parent=28 // pred_check
          _
        $region35: #{tpu_custom_call.1} parent=28 // pred_check_branch
          %240 = sbr.rel (0) target = $region37
        $region36: #{tpu_custom_call.1} parent=28 // pred_region
          %s242 = ssub.s32 4, 1
          loop: start=0, step=1, limit=1
          $region38: #{tpu_custom_call.1} parent=36 // loop_pre_header
            _
          $region39: #{tpu_custom_call.1} parent=36 // loop_header
            %s244 = sphi 0, %s248
            %p245 = scmp.ge.s32.totalorder %s244, 1
            %s249 = sphi [#allocation3], [#allocation3]
            %s250 = sphi %s5, %s5
          $region40: #{tpu_custom_call.1} parent=36 // loop_header_branch
            %247 = sbr.rel (%p245) target = $region44
          $region41: #{tpu_custom_call.1} parent=36 // loop_body
            %v251 = vld [vmem:[%s249] sm:%s242]
            %252 = vst [vmem:[%s250] sm:%s242] %v251
          $region42: #{tpu_custom_call.1} parent=36 // loop_footer
            %s248 = sadd.s32 1, %s244
          $region43: #{tpu_custom_call.1} parent=36 // loop_footer_branch
            %243 = sbr.rel target = $region39
          $region44: #{tpu_custom_call.1} parent=36 // loop_exit
            _
        $region37: #{tpu_custom_call.1} parent=28 // pred_fallthru
          _
      $region29: #{tpu_custom_call.1} parent=24 // pred_fallthru
        _
      %267 = vnop
    $region25: #{tpu_custom_call.1} parent=1 // pred_fallthru
      _
    // Predicated region
    $region56: #{tpu_custom_call.1} parent=1 // pred_check
      _
    $region57: #{tpu_custom_call.1} parent=1 // pred_check_branch
      %269 = sbr.rel (0) target = $region59
    $region58: #{tpu_custom_call.1} parent=1 // pred_region
      _
    $region59: #{tpu_custom_call.1} parent=1 // pred_fallthru
      _

</llo_original>
